<compile_context>
chip_gen: v6e
topology: v6e:2x2x1
jax: 0.10.0
libtpu: 0.0.40
codegen_flags: <defaults>
</compile_context>

<pallas_src>
import functools

import jax
import jax.numpy as jnp
from jax import lax
from jax.experimental import pallas as pl
from jax.experimental.pallas import tpu as pltpu


def _npair_loss_kernel(desc_ref, code_ref, loss_ref, *, scale, block_rows):
    """Per-row-tile NPair (InfoNCE) loss.

    desc_ref : (tm, D) row tile of descriptions            (VMEM, native dtype)
    code_ref : (B,  D) all code representations, resident  (VMEM, native dtype)
    loss_ref : (tm, 1) per-row loss = logsumexp(row) - diag(row)
    """
    i = pl.program_id(0)

    desc = desc_ref[...]                       # (tm, D), native dtype (bf16 ok)
    code = code_ref[...]                       # (B,  D)

    # scores[r, c] = scale * <desc[r], code[c]>. Contract the LAST dim of both
    # operands on the MXU (no explicit transpose), accumulate in f32.
    scores = lax.dot_general(
        desc, code,
        dimension_numbers=(((1,), (1,)), ((), ())),
        preferred_element_type=jnp.float32,
    ) * jnp.float32(scale)                     # (tm, B) f32

    # Numerically-stable logsumexp over the "class" (column) axis, all in f32.
    m = jnp.max(scores, axis=-1, keepdims=True)                          # (tm,1)
    lse = m + jnp.log(jnp.sum(jnp.exp(scores - m), axis=-1, keepdims=True))

    # Target logits: global row g has label g, i.e. scale * <desc[g], code[g]>.
    # Computed directly from operands already in VMEM (O(tm*D) VPU work),
    # instead of building (B,B) iotas + select + masked XLU reduction.
    start = pl.multiple_of(i * block_rows, block_rows)
    code_rows = code_ref[pl.ds(start, block_rows), :]                    # (tm,D)
    diag = jnp.sum(desc.astype(jnp.float32) * code_rows.astype(jnp.float32),
                   axis=-1, keepdims=True) * jnp.float32(scale)          # (tm,1)

    loss_ref[...] = lse - diag


def _pick_row_tile(batch):
    # 256-wide tiles fill the v6e/v7x MXU; 128 suffices on v5e. Fall back to
    # smaller sublane-aligned divisors, else take the whole batch in one block.
    for tm in (256, 128, 64, 32, 16, 8):
        if batch % tm == 0:
            return tm
    return batch


def npair_loss(desc_repr, code_repr, scale=20.0, block_rows=None):
    """Pallas implementation of NPairLoss.forward. Returns a scalar f32."""
    assert desc_repr.shape == code_repr.shape and desc_repr.ndim == 2
    B, D = desc_repr.shape
    tm = _pick_row_tile(B) if block_rows is None else block_rows
    assert B % tm == 0, "row tile must divide the batch"

    # TODO(synk): for very large B*D the resident code table / (tm, B) score
    # tile no longer fit VMEM (64 MiB on v7x); that regime needs a
    # column-tiled online-logsumexp variant with running (m, l) scratch.
    kernel = functools.partial(
        _npair_loss_kernel, scale=float(scale), block_rows=tm)

    per_row = pl.pallas_call(
        kernel,
        out_shape=jax.ShapeDtypeStruct((B, 1), jnp.float32),
        grid_spec=pltpu.PrefetchScalarGridSpec(
            num_scalar_prefetch=0,
            grid=(B // tm,),
            in_specs=[
                pl.BlockSpec((tm, D), lambda i: (i, 0)),   # desc row tile
                pl.BlockSpec((B, D), lambda i: (0, 0)),    # code, VMEM-resident
            ],
            out_specs=pl.BlockSpec((tm, 1), lambda i: (i, 0)),
        ),
        compiler_params=pltpu.CompilerParams(
            dimension_semantics=("parallel",)),
    )(desc_repr, code_repr)

    return jnp.mean(per_row)


def _npair_loss_ref(desc_repr, code_repr, scale=20.0):
    # Pure-JAX reference, mirrors torch.einsum + nn.CrossEntropyLoss.
    scores = jnp.einsum("ab,cb->ac", desc_repr, code_repr).astype(jnp.float32)
    scores = scores * scale
    b = scores.shape[0]
    logp = jax.nn.log_softmax(scores, axis=-1)
    return -jnp.mean(logp[jnp.arange(b), jnp.arange(b)])


if __name__ == "__main__":
    SCALE = 20.0  # self.params.scale
    key = jax.random.PRNGKey(0)

    # Case 1: module-spec-sized problem (single tile).
    B, D = 8, 32
    k1, k2, key = (*jax.random.split(key, 2), key)
    desc = jax.random.normal(k1, (B, D), dtype=jnp.float32)
    code = jax.random.normal(k2, (B, D), dtype=jnp.float32)
    loss = jax.block_until_ready(npair_loss(desc, code, scale=SCALE))
    ref = jax.block_until_ready(_npair_loss_ref(desc, code, scale=SCALE))
    assert jnp.allclose(loss, ref, rtol=1e-5, atol=1e-5), (loss, ref)

    # Case 2: exercises the multi-tile row grid (B=24 -> 3 tiles of 8 rows).
    B2, D2 = 24, 64
    k3, k4 = jax.random.split(key)
    desc2 = jax.random.normal(k3, (B2, D2), dtype=jnp.float32)
    code2 = jax.random.normal(k4, (B2, D2), dtype=jnp.float32)
    loss2 = jax.block_until_ready(npair_loss(desc2, code2, scale=SCALE))
    ref2 = jax.block_until_ready(_npair_loss_ref(desc2, code2, scale=SCALE))
    assert jnp.allclose(loss2, ref2, rtol=1e-5, atol=1e-5), (loss2, ref2)

    print("KERNEL_OK")
</pallas_src>

<mosaic_0001>
module attributes {stable_mosaic.version = 11 : i64} {
  func.func @_npair_loss_kernel(%arg0: i32, %arg1: memref<8x32xf32, #tpu.memory_space<vmem>>, %arg2: memref<8x32xf32, #tpu.memory_space<vmem>>, %arg3: memref<8x1xf32, #tpu.memory_space<vmem>>) attributes {dimension_semantics = [#tpu.dimension_semantics<parallel>], iteration_bounds = array<i64: 1>, scalar_prefetch = 0 : i64, scratch_operands = 0 : i64, tpu.core_type = #tpu.core_type<tc>, window_params = [{transform_indices = @transform_0, window_bounds = array<i64: 8, 32>}, {pipeline_mode = #tpu.pipeline_mode<synchronous>, transform_indices = @transform_1, window_bounds = array<i64: 8, 32>}, {transform_indices = @transform_2, window_bounds = array<i64: 8, 1>}]} {
    %c0 = arith.constant 0 : index
    %c0_0 = arith.constant 0 : index
    %0 = vector.load %arg1[%c0, %c0_0] : memref<8x32xf32, #tpu.memory_space<vmem>>, vector<8x32xf32>
    %c0_1 = arith.constant 0 : index
    %c0_2 = arith.constant 0 : index
    %1 = vector.load %arg2[%c0_1, %c0_2] : memref<8x32xf32, #tpu.memory_space<vmem>>, vector<8x32xf32>
    %cst = arith.constant dense<0.000000e+00> : vector<8x8xf32>
    %2 = tpu.matmul %0, %1, %cst {dimension_numbers = #tpu.dot_dimension_numbers<[1], [1], [0], [0], [0, 0, 1, 0], [], []>} : vector<8x32xf32>, vector<8x32xf32>, vector<8x8xf32> -> vector<8x8xf32>
    %cst_3 = arith.constant 2.000000e+01 : f32
    %3 = vector.broadcast %cst_3 : f32 to vector<8x8xf32>
    %4 = arith.mulf %2, %3 : vector<8x8xf32>
    %cst_4 = arith.constant dense<0xFF800000> : vector<8xf32>
    %5 = vector.multi_reduction <maximumf>, %4, %cst_4 [1] : vector<8x8xf32> to vector<8xf32>
    %6 = vector.shape_cast %5 : vector<8xf32> to vector<8x1xf32>
    %7 = vector.broadcast %6 : vector<8x1xf32> to vector<8x8xf32>
    %8 = arith.subf %4, %7 : vector<8x8xf32>
    %9 = math.exp %8 : vector<8x8xf32>
    %cst_5 = arith.constant dense<0.000000e+00> : vector<8xf32>
    %10 = vector.multi_reduction <add>, %9, %cst_5 [1] : vector<8x8xf32> to vector<8xf32>
    %11 = vector.shape_cast %10 : vector<8xf32> to vector<8x1xf32>
    %12 = math.log %11 : vector<8x1xf32>
    %13 = arith.addf %6, %12 : vector<8x1xf32>
    %c8_i32 = arith.constant 8 : i32
    %14 = arith.muli %arg0, %c8_i32 : i32
    %15 = tpu.assume_multiple %14, 8 : i32
    %16 = arith.index_cast %15 : i32 to index
    %c0_6 = arith.constant 0 : index
    %17 = vector.load %arg2[%16, %c0_6] : memref<8x32xf32, #tpu.memory_space<vmem>>, vector<8x32xf32>
    %18 = arith.mulf %0, %17 : vector<8x32xf32>
    %cst_7 = arith.constant dense<0.000000e+00> : vector<8xf32>
    %19 = vector.multi_reduction <add>, %18, %cst_7 [1] : vector<8x32xf32> to vector<8xf32>
    %20 = vector.shape_cast %19 : vector<8xf32> to vector<8x1xf32>
    %cst_8 = arith.constant 2.000000e+01 : f32
    %21 = vector.broadcast %cst_8 : f32 to vector<8x1xf32>
    %22 = arith.mulf %20, %21 : vector<8x1xf32>
    %23 = arith.subf %13, %22 : vector<8x1xf32>
    %c0_9 = arith.constant 0 : index
    %c0_10 = arith.constant 0 : index
    %24 = vector.load %arg3[%c0_9, %c0_10] : memref<8x1xf32, #tpu.memory_space<vmem>>, vector<8x1xf32>
    tpu.vector_store %arg3[%c0_9, %c0_10], %23 {strides = array<i32>} : memref<8x1xf32, #tpu.memory_space<vmem>>, vector<8x1xf32>,
    return
  }
  func.func @transform_0(%arg0: i32) -> (i32, i32) {
    %c0_i32 = arith.constant 0 : i32
    %c0_i32_0 = arith.constant 0 : i32
    return %arg0, %c0_i32 : i32, i32
  }
  func.func @transform_1(%arg0: i32) -> (i32, i32) {
    %c0_i32 = arith.constant 0 : i32
    %c0_i32_0 = arith.constant 0 : i32
    %c0_i32_1 = arith.constant 0 : i32
    return %c0_i32, %c0_i32_0 : i32, i32
  }
  func.func @transform_2(%arg0: i32) -> (i32, i32) {
    %c0_i32 = arith.constant 0 : i32
    %c0_i32_0 = arith.constant 0 : i32
    return %arg0, %c0_i32 : i32, i32
  }
}

</mosaic_0001>

<llo_original>
// kernel: tpu_custom_call.1
$region0: #{tpu_custom_call.1}
  #allocation0 [shape = 'u32[]', space=smem, size = 0x4, offset = 0x4, fixed_abs, tag = 'smem constant byte address 0x4 - core index']
  #allocation1 [shape = 'u32[144,128]{1,0:T(1,128)}', space=vmem, size = 0x12000, scoped, tag = 'internal scratch']
  %s0 = inlined_call_operand.hbm [shape: f32[8,32], index: 0, kind: input, shape index: {}]
  %s1 = inlined_call_operand.hbm [shape: f32[8,32], index: 1, kind: input, shape index: {}]
  %s2 = inlined_call_operand.vmem [shape: f32[8,1], index: 2, kind: output, shape index: {}]
  %s3 = sld [smem:[#allocation0]]
  $region26: #{tpu_custom_call.1} parent=0
    _
  %s5 = ssub.s32 1, %s3
  %s6 = scalar_select 0, %s5, %s3
  $region1: #{tpu_custom_call.1} parent=0
    #allocation2 [shape = 'u8[4096]{0}', space=vmem, size = 0x1000, scoped, tag = 'input window, operand 0, single buffered']
    #allocation3 [shape = 's32[1]{0}', space=sflag, size = 0x4, scoped, tag = 'scoped memory for tpu_custom_call.1']
    #allocation4 [shape = 'u8[4096]{0}', space=vmem, size = 0x1000, scoped, tag = 'input window, operand 1, single buffered']
    #allocation5 [shape = 's32[1]{0}', space=sflag, size = 0x4, scoped, tag = 'scoped memory for tpu_custom_call.1']
    %7 = vsyncpa [#allocation3], 0
    %8 = vsyncpa [#allocation5], 0
    // Predicated region
    $region2: #{tpu_custom_call.1} parent=1 // pred_check
      _
    $region3: #{tpu_custom_call.1} parent=1 // pred_check_branch
      %10 = sbr.rel (0) target = $region5
    $region4: #{tpu_custom_call.1} parent=1 // pred_region
      %s12 = ssub.s32 128, 128
      %13 = vsyncadd [#allocation3], %s12
      %s15 = sshll.u32 [#allocation2], 4
      %s16 = int_to_ptr.vmem [resolvable:$true] %s15
      %18 = dma.hbm_to_vmem [thread:$0]  %s0, 128, %s16, [#allocation3]
    $region5: #{tpu_custom_call.1} parent=1 // pred_fallthru
      _
    // Predicated region
    $region6: #{tpu_custom_call.1} parent=1 // pred_check
      _
    $region7: #{tpu_custom_call.1} parent=1 // pred_check_branch
      %20 = sbr.rel (0) target = $region9
    $region8: #{tpu_custom_call.1} parent=1 // pred_region
      %s22 = ssub.s32 128, 128
      %23 = vsyncadd [#allocation5], %s22
      %s25 = sshll.u32 [#allocation4], 4
      %s26 = int_to_ptr.vmem [resolvable:$true] %s25
      %28 = dma.hbm_to_vmem [thread:$0]  %s1, 128, %s26, [#allocation5]
    $region9: #{tpu_custom_call.1} parent=1 // pred_fallthru
      _
    // Predicated region
    $region10: #{tpu_custom_call.1} parent=1 // pred_check
      _
    $region11: #{tpu_custom_call.1} parent=1 // pred_check_branch
      %30 = sbr.rel (0) target = $region13
    $region12: #{tpu_custom_call.1} parent=1 // pred_region
      %31 = dma.done [#allocation3], 128
    $region13: #{tpu_custom_call.1} parent=1 // pred_fallthru
      _
    // Predicated region
    $region14: #{tpu_custom_call.1} parent=1 // pred_check
      _
    $region15: #{tpu_custom_call.1} parent=1 // pred_check_branch
      %33 = sbr.rel (0) target = $region17
    $region16: #{tpu_custom_call.1} parent=1 // pred_region
      %34 = dma.done [#allocation5], 128
    $region17: #{tpu_custom_call.1} parent=1 // pred_fallthru
      _
    %v35 = vld [vmem:[#allocation2] sm:$0xff]
    %v36 = vld [vmem:[#allocation4] sm:$0xff]
    %vm37 = vcmask 261120
    %v39 = vsel %vm37, %v35, 0
    %v42 = vsel %vm37, %v36, 0
    %44 = vmatprep.subr.mxu0 0.0
    %45 = vmatpush1.xpose.msra.mxu0 0.0
    %46 = vmatprep.subr.mxu0 0.0
    %47 = vmatpush1.xpose.msra.mxu0 0.0
    %48 = vmatprep.subr.mxu0 0.0
    %49 = vmatpush1.xpose.msra.mxu0 0.0
    %50 = vmatprep.subr.mxu0 0.0
    %51 = vmatpush1.xpose.msra.mxu0 0.0
    %52 = vmatprep.subr.mxu0 0.0
    %53 = vmatpush1.xpose.msra.mxu0 0.0
    %54 = vmatprep.subr.mxu0 0.0
    %55 = vmatpush1.xpose.msra.mxu0 0.0
    %56 = vmatprep.subr.mxu0 0.0
    %57 = vmatpush1.xpose.msra.mxu0 0.0
    %58 = vmatprep.subr.mxu0 0.0
    %59 = vmatpush1.xpose.msra.mxu0 0.0
    %60 = vmatprep.subr.mxu0 0.0
    %61 = vmatpush1.xpose.msra.mxu0 0.0
    %62 = vmatprep.subr.mxu0 0.0
    %63 = vmatpush1.xpose.msra.mxu0 0.0
    %64 = vmatprep.subr.mxu0 0.0
    %65 = vmatpush1.xpose.msra.mxu0 0.0
    %66 = vmatprep.subr.mxu0 0.0
    %67 = vmatpush1.xpose.msra.mxu0 0.0
    %68 = vmatprep.subr.mxu0 0.0
    %69 = vmatpush1.xpose.msra.mxu0 0.0
    %70 = vmatprep.subr.mxu0 0.0
    %71 = vmatpush1.xpose.msra.mxu0 0.0
    %72 = vmatprep.subr.mxu0 0.0
    %73 = vmatpush1.xpose.msra.mxu0 0.0
    %74 = vmatprep.subr.mxu0 0.0
    %75 = vmatpush1.xpose.msra.mxu0 %v42
    %76 = vmatprep.subr.mxu0 0.0
    %77 = vmatpush2.xpose.msra.mxu0 0.0
    %78 = vmatprep.subr.mxu0 0.0
    %79 = vmatpush2.xpose.msra.mxu0 0.0
    %80 = vmatprep.subr.mxu0 0.0
    %81 = vmatpush2.xpose.msra.mxu0 0.0
    %82 = vmatprep.subr.mxu0 0.0
    %83 = vmatpush2.xpose.msra.mxu0 0.0
    %84 = vmatprep.subr.mxu0 0.0
    %85 = vmatpush2.xpose.msra.mxu0 0.0
    %86 = vmatprep.subr.mxu0 0.0
    %87 = vmatpush2.xpose.msra.mxu0 0.0
    %88 = vmatprep.subr.mxu0 0.0
    %89 = vmatpush2.xpose.msra.mxu0 0.0
    %90 = vmatprep.subr.mxu0 0.0
    %91 = vmatpush2.xpose.msra.mxu0 0.0
    %92 = vmatprep.subr.mxu0 0.0
    %93 = vmatpush2.xpose.msra.mxu0 0.0
    %94 = vmatprep.subr.mxu0 0.0
    %95 = vmatpush2.xpose.msra.mxu0 0.0
    %96 = vmatprep.subr.mxu0 0.0
    %97 = vmatpush2.xpose.msra.mxu0 0.0
    %98 = vmatprep.subr.mxu0 0.0
    %99 = vmatpush2.xpose.msra.mxu0 0.0
    %100 = vmatprep.subr.mxu0 0.0
    %101 = vmatpush2.xpose.msra.mxu0 0.0
    %102 = vmatprep.subr.mxu0 0.0
    %103 = vmatpush2.xpose.msra.mxu0 0.0
    %104 = vmatprep.subr.mxu0 0.0
    %105 = vmatpush2.xpose.msra.mxu0 0.0
    %106 = vmatprep.subr.mxu0 0.0
    %107 = vmatpush2.xpose.msra.mxu0 0.0
    %108 = vmatprep.mubr.f32.mxu0 0.0
    %109 = vmatmul.mubr.f32.gmra.mxu0 %v39
    %v110 = vpop.f32.mrf.mxu0
    %v111 = vadd.f32 0.0, %v110
    %v112 = vpop.f32.mrf.mxu0
    %113 = vdwg.mxu0
    %v114 = vmul.f32 %v111, 20.0
    %vm115 = vcmask 64512
    %v116 = vsel %vm115, %v114, -inf
    %117 = vmax.xlane.f32.xlu0 %v116
    %v118 = vpop.xlane.xlu0 %117
    %v119 = vsub.f32 %v114, %v118
    %v120 = vmul.f32 %v119, 1.442695
    %v121 = vpow.pop %v120
    %v122 = vsel %vm115, %v121, 0.0
    %123 = vadd.xlane.f32.xlu0 %v122
    %v124 = vpop.xlane.xlu0 %123
    %v125 = vlog2.pop %v124
    %v126 = vmul.f32 %v125, 0.6931472
    %v127 = vadd.f32 %v118, %v126
    %s128 = smul.u32 0, 8
    %s129 = scalar_lea.vmem [#allocation4], %s128
    %v130 = vld [vmem:[%s129] sm:$0xff]
    %v131 = vmul.f32 %v35, %v130
    %v132 = vsel %vm37, %v131, 0.0
    %133 = vadd.xlane.f32.xlu0 %v132
    %v134 = vpop.xlane.xlu0 %133
    %v135 = vmul.f32 %v134, 20.0
    %v136 = vsub.f32 %v127, %v135
    %vm137 = vcmask 7168
    %138 = vst.msk [vmem:[%s2] sm:$0xff] %vm137, %v136
    // Predicated region
    $region18: #{tpu_custom_call.1} parent=1 // pred_check
      _
    $region19: #{tpu_custom_call.1} parent=1 // pred_check_branch
      %140 = sbr.rel (0) target = $region21
    $region20: #{tpu_custom_call.1} parent=1 // pred_region
      _
    $region21: #{tpu_custom_call.1} parent=1 // pred_fallthru
      _
    // Predicated region
    $region22: #{tpu_custom_call.1} parent=1 // pred_check
      _
    $region23: #{tpu_custom_call.1} parent=1 // pred_check_branch
      %142 = sbr.rel (0) target = $region25
    $region24: #{tpu_custom_call.1} parent=1 // pred_region
      _
    $region25: #{tpu_custom_call.1} parent=1 // pred_fallthru
      _
    %143 = vsyncpa [#allocation3], 1
    %144 = vsyncpa [#allocation5], 1

</llo_original>
